<compile_context>
chip_gen: v7x
topology: tpu7x:2x2x1
jax: 0.10.0
libtpu: 0.0.40
codegen_flags: <defaults>
</compile_context>

<pallas_src>
import functools

import jax
import jax.numpy as jnp
from jax.experimental import pallas as pl
from jax.experimental.pallas import tpu as pltpu


def _round_up(x: int, m: int) -> int:
    return ((x + m - 1) // m) * m


def _vmem_capacity_bytes() -> int:
    # Per-generation VMEM (v5e/v6e: 128 MiB, v7x: 64 MiB per TC).  Fall back
    # to the most conservative value if the query is unavailable (interpret).
    try:
        return int(pltpu.get_tpu_info().vmem_capacity_bytes)
    except Exception:
        return 64 * 1024 * 1024


def _pick_tiles(B: int, L: int, O: int, block_m: int):
    """Choose (TM, TN) respecting the (8,128) rule and a VMEM budget."""
    block_m = max(8, _round_up(block_m, 8))

    # Batch tile: full dim when tiny (exempt from the sublane rule); otherwise
    # split so there are >= 2 grid steps (both v7x TensorCores get work).
    if B < 16:
        tm = B
    else:
        tm = min(block_m, _round_up(pl.cdiv(B, 2), 8))

    # Feature tile: full O when small / avoids padding; else lane-dense 512.
    tn = O if O <= 512 else 512

    # Keep the per-step double-buffered footprint within ~40% of VMEM.
    budget = int(0.4 * _vmem_capacity_bytes())

    def footprint(tm_, tn_):
        # 2x (double buffer) for z, w, out tiles + row vectors, f32 bytes.
        return 4 * (2 * tm_ * L + 2 * L * tn_ + 2 * tm_ * tn_ + 6 * tn_)

    while tn > 128 and footprint(tm, tn) > budget:
        tn = max(128, ((tn // 2) // 128) * 128)          # stay lane-aligned
    while tm > 8 and tm != B and footprint(tm, tn) > budget:
        tm = max(8, _round_up(tm // 2, 8))               # stay sublane-aligned
    return tm, tn


def _decoder_kernel_bounded(z_ref, w_ref, b_ref, lb_ref, rng_ref, o_ref):
    # (TM, L) @ (L, TN) on the MXU with f32 accumulation.
    y = jnp.dot(z_ref[...], w_ref[...], preferred_element_type=jnp.float32)
    y = y + b_ref[...]
    # Exact sigmoid via tanh: single EUP op + cheap VPU mul/add.
    s = 0.5 * (jnp.tanh(0.5 * y) + 1.0)
    o_ref[...] = (lb_ref[...] + rng_ref[...] * s).astype(o_ref.dtype)


def _decoder_kernel_nobounds(z_ref, w_ref, b_ref, o_ref):
    y = jnp.dot(z_ref[...], w_ref[...], preferred_element_type=jnp.float32)
    o_ref[...] = (y + b_ref[...]).astype(o_ref.dtype)


@functools.partial(jax.jit, static_argnames=("block_m",))
def _decoder_call(z, weight_t, bias, lb, rng, block_m):
    B, L = z.shape
    O = weight_t.shape[1]
    bounded = lb is not None
    out_dtype = bias.dtype

    tm, tn = _pick_tiles(B, L, O, block_m)
    grid = (pl.cdiv(B, tm), pl.cdiv(O, tn))   # partial blocks handled by masking

    bias2 = bias.reshape(1, O)

    z_spec = pl.BlockSpec((tm, L), lambda i, j: (i, 0))
    w_spec = pl.BlockSpec((L, tn), lambda i, j: (0, j))
    row_spec = pl.BlockSpec((1, tn), lambda i, j: (0, j))
    out_spec = pl.BlockSpec((tm, tn), lambda i, j: (i, j))

    cost = pl.CostEstimate(
        flops=2 * B * L * O,
        transcendentals=(B * O if bounded else 0),
        bytes_accessed=4 * (B * L + L * O + B * O + (4 if bounded else 1) * O),
    )
    compiler_params = pltpu.CompilerParams(
        dimension_semantics=("parallel", "parallel"))
    out_shape = jax.ShapeDtypeStruct((B, O), out_dtype)

    if bounded:
        lb2 = lb.reshape(1, O)
        rng2 = rng.reshape(1, O)
        return pl.pallas_call(
            _decoder_kernel_bounded,
            out_shape=out_shape,
            grid=grid,
            in_specs=[z_spec, w_spec, row_spec, row_spec, row_spec],
            out_specs=out_spec,
            compiler_params=compiler_params,
            cost_estimate=cost,
        )(z, weight_t, bias2, lb2, rng2)

    return pl.pallas_call(
        _decoder_kernel_nobounds,
        out_shape=out_shape,
        grid=grid,
        in_specs=[z_spec, w_spec, row_spec],
        out_specs=out_spec,
        compiler_params=compiler_params,
        cost_estimate=cost,
    )(z, weight_t, bias2)


def decoder_trivial(z, weight_t, bias, lb=None, ub=None, *, block_m=256,
                    use_bf16=False):
    """Pallas forward pass for DecoderTrivial.

    z:        (B, latent_dim)            float32
    weight_t: (latent_dim, output_dim)   float32 (PyTorch weight, transposed)
    bias:     (output_dim,)              float32
    lb, ub:   (output_dim,)              float32, or both None
    block_m:  max batch tile per grid step.
    use_bf16: cast z / weight to bf16 for MXU-bound shapes (f32 accumulation
              is kept); leave False for bit-faithful f32 numerics.
    """
    if (lb is None) != (ub is None):
        raise ValueError("decoder_trivial: provide both lb and ub, or neither.")
    rng = None if lb is None else (ub - lb)   # precompute the range once
    if use_bf16:
        z = z.astype(jnp.bfloat16)
        weight_t = weight_t.astype(jnp.bfloat16)
    return _decoder_call(z, weight_t, bias, lb, rng, block_m)


if __name__ == "__main__":
    key = jax.random.PRNGKey(0)
    k_z, k_w, k_b = jax.random.split(key, 3)

    batch = 8
    latent_dim = 32
    output_dim = 16

    z = jax.random.normal(k_z, (batch, latent_dim), dtype=jnp.float32)
    # PyTorch Linear weight is (output_dim, latent_dim); stored transposed.
    weight_t = jax.random.normal(k_w, (latent_dim, output_dim), dtype=jnp.float32) * 0.1
    bias = jax.random.normal(k_b, (output_dim,), dtype=jnp.float32) * 0.1

    # Per-output (lb, ub) bounds, deterministic.
    lb = -1.0 + 0.05 * jnp.arange(output_dim, dtype=jnp.float32)
    ub = 1.0 + 0.05 * jnp.arange(output_dim, dtype=jnp.float32)

    # Bounded path.
    out = jax.block_until_ready(decoder_trivial(z, weight_t, bias, lb, ub))
    ref = lb[None, :] + (ub - lb)[None, :] * jax.nn.sigmoid(z @ weight_t + bias[None, :])
    assert out.shape == (batch, output_dim)
    assert jnp.allclose(out, ref, atol=1e-4, rtol=1e-4)

    # No-bounds path (plain linear, tight tolerance).
    out_nb = jax.block_until_ready(decoder_trivial(z, weight_t, bias))
    ref_nb = z @ weight_t + bias[None, :]
    assert out_nb.shape == (batch, output_dim)
    assert jnp.allclose(out_nb, ref_nb, atol=1e-5, rtol=1e-5)

    print("KERNEL_OK")
</pallas_src>

<mosaic_0001>
module attributes {stable_mosaic.version = 11 : i64} {
  func.func @_decoder_kernel_bounded(%arg0: i32, %arg1: i32, %arg2: memref<8x32xf32, #tpu.memory_space<vmem>>, %arg3: memref<32x16xf32, #tpu.memory_space<vmem>>, %arg4: memref<1x16xf32, #tpu.memory_space<vmem>>, %arg5: memref<1x16xf32, #tpu.memory_space<vmem>>, %arg6: memref<1x16xf32, #tpu.memory_space<vmem>>, %arg7: memref<8x16xf32, #tpu.memory_space<vmem>>) attributes {dimension_semantics = [#tpu.dimension_semantics<parallel>, #tpu.dimension_semantics<parallel>], iteration_bounds = array<i64: 1, 1>, scalar_prefetch = 0 : i64, scratch_operands = 0 : i64, tpu.core_type = #tpu.core_type<tc>, window_params = [{transform_indices = @transform_0, window_bounds = array<i64: 8, 32>}, {transform_indices = @transform_1, window_bounds = array<i64: 32, 16>}, {transform_indices = @transform_2, window_bounds = array<i64: 1, 16>}, {transform_indices = @transform_3, window_bounds = array<i64: 1, 16>}, {transform_indices = @transform_4, window_bounds = array<i64: 1, 16>}, {transform_indices = @transform_5, window_bounds = array<i64: 8, 16>}]} {
    %c0 = arith.constant 0 : index
    %c0_0 = arith.constant 0 : index
    %0 = vector.load %arg2[%c0, %c0_0] : memref<8x32xf32, #tpu.memory_space<vmem>>, vector<8x32xf32>
    %c0_1 = arith.constant 0 : index
    %c0_2 = arith.constant 0 : index
    %1 = vector.load %arg3[%c0_1, %c0_2] : memref<32x16xf32, #tpu.memory_space<vmem>>, vector<32x16xf32>
    %cst = arith.constant dense<0.000000e+00> : vector<8x16xf32>
    %2 = tpu.matmul %0, %1, %cst {dimension_numbers = #tpu.dot_dimension_numbers<[1], [0], [0], [1], [0, 0, 1, 1], [], []>} : vector<8x32xf32>, vector<32x16xf32>, vector<8x16xf32> -> vector<8x16xf32>
    %c0_3 = arith.constant 0 : index
    %c0_4 = arith.constant 0 : index
    %3 = vector.load %arg4[%c0_3, %c0_4] : memref<1x16xf32, #tpu.memory_space<vmem>>, vector<1x16xf32>
    %4 = vector.broadcast %3 : vector<1x16xf32> to vector<8x16xf32>
    %5 = arith.addf %2, %4 : vector<8x16xf32>
    %cst_5 = arith.constant 5.000000e-01 : f32
    %6 = vector.broadcast %cst_5 : f32 to vector<8x16xf32>
    %7 = arith.mulf %6, %5 : vector<8x16xf32>
    %8 = math.tanh %7 : vector<8x16xf32>
    %cst_6 = arith.constant 1.000000e+00 : f32
    %9 = vector.broadcast %cst_6 : f32 to vector<8x16xf32>
    %10 = arith.addf %8, %9 : vector<8x16xf32>
    %cst_7 = arith.constant 5.000000e-01 : f32
    %11 = vector.broadcast %cst_7 : f32 to vector<8x16xf32>
    %12 = arith.mulf %11, %10 : vector<8x16xf32>
    %c0_8 = arith.constant 0 : index
    %c0_9 = arith.constant 0 : index
    %13 = vector.load %arg5[%c0_8, %c0_9] : memref<1x16xf32, #tpu.memory_space<vmem>>, vector<1x16xf32>
    %c0_10 = arith.constant 0 : index
    %c0_11 = arith.constant 0 : index
    %14 = vector.load %arg6[%c0_10, %c0_11] : memref<1x16xf32, #tpu.memory_space<vmem>>, vector<1x16xf32>
    %15 = vector.broadcast %14 : vector<1x16xf32> to vector<8x16xf32>
    %16 = arith.mulf %15, %12 : vector<8x16xf32>
    %17 = vector.broadcast %13 : vector<1x16xf32> to vector<8x16xf32>
    %18 = arith.addf %17, %16 : vector<8x16xf32>
    %c0_12 = arith.constant 0 : index
    %c0_13 = arith.constant 0 : index
    %19 = vector.load %arg7[%c0_12, %c0_13] : memref<8x16xf32, #tpu.memory_space<vmem>>, vector<8x16xf32>
    tpu.vector_store %arg7[%c0_12, %c0_13], %18 {strides = array<i32>} : memref<8x16xf32, #tpu.memory_space<vmem>>, vector<8x16xf32>,
    return
  }
  func.func @transform_0(%arg0: i32, %arg1: i32) -> (i32, i32) {
    %c0_i32 = arith.constant 0 : i32
    %c0_i32_0 = arith.constant 0 : i32
    return %arg0, %c0_i32 : i32, i32
  }
  func.func @transform_1(%arg0: i32, %arg1: i32) -> (i32, i32) {
    %c0_i32 = arith.constant 0 : i32
    %c0_i32_0 = arith.constant 0 : i32
    return %c0_i32, %arg1 : i32, i32
  }
  func.func @transform_2(%arg0: i32, %arg1: i32) -> (i32, i32) {
    %c0_i32 = arith.constant 0 : i32
    %c0_i32_0 = arith.constant 0 : i32
    return %c0_i32, %arg1 : i32, i32
  }
  func.func @transform_3(%arg0: i32, %arg1: i32) -> (i32, i32) {
    %c0_i32 = arith.constant 0 : i32
    %c0_i32_0 = arith.constant 0 : i32
    return %c0_i32, %arg1 : i32, i32
  }
  func.func @transform_4(%arg0: i32, %arg1: i32) -> (i32, i32) {
    %c0_i32 = arith.constant 0 : i32
    %c0_i32_0 = arith.constant 0 : i32
    return %c0_i32, %arg1 : i32, i32
  }
  func.func @transform_5(%arg0: i32, %arg1: i32) -> (i32, i32) {
    %c0_i32 = arith.constant 0 : i32
    return %arg0, %arg1 : i32, i32
  }
}

</mosaic_0001>

<llo_original>
// kernel: _decoder_call.1
$region0: #{_decoder_call.1}
  #allocation0 [shape = 'u32[]', space=smem, size = 0x4, offset = 0x4, fixed_abs, tag = 'smem constant byte address 0x4 - core index']
  #allocation1 [shape = 'u32[144,128]{1,0:T(1,128)}', space=vmem, size = 0x12000, scoped, tag = 'internal scratch']
  %s0 = inlined_call_operand.vmem [shape: f32[8,32], index: 0, kind: input, shape index: {}]
  %s1 = inlined_call_operand.vmem [shape: f32[32,16], index: 1, kind: input, shape index: {}]
  %s2 = inlined_call_operand.vmem [shape: f32[1,16], index: 2, kind: input, shape index: {}]
  %s3 = inlined_call_operand.vmem [shape: f32[1,16], index: 3, kind: input, shape index: {}]
  %s4 = inlined_call_operand.vmem [shape: f32[1,16], index: 4, kind: input, shape index: {}]
  %s5 = inlined_call_operand.hbm [shape: f32[8,16], index: 5, kind: output, shape index: {}]
  %s6 = sld [smem:[#allocation0]]
  $region30: #{_decoder_call.1} parent=0
    _
  %s8 = ssub.s32 1, %s6
  %s9 = scalar_select 0, %s8, %s6
  $region1: #{_decoder_call.1} parent=0
    #allocation2 [shape = 'u8[4096]{0}', space=vmem, size = 0x1000, scoped, tag = 'output window, operand 0, single buffered']
    #allocation3 [shape = 's32[1]{0}', space=sflag, size = 0x4, scoped, tag = 'scoped memory for _decoder_call.1']
    %10 = vsyncpa [#allocation3], 0
    // Predicated region
    $region2: #{_decoder_call.1} parent=1 // pred_check
      _
    $region3: #{_decoder_call.1} parent=1 // pred_check_branch
      %12 = sbr.rel (0) target = $region5
    $region4: #{_decoder_call.1} parent=1 // pred_region
      _
    $region5: #{_decoder_call.1} parent=1 // pred_fallthru
      _
    // Predicated region
    $region6: #{_decoder_call.1} parent=1 // pred_check
      _
    $region7: #{_decoder_call.1} parent=1 // pred_check_branch
      %14 = sbr.rel (0) target = $region9
    $region8: #{_decoder_call.1} parent=1 // pred_region
      _
    $region9: #{_decoder_call.1} parent=1 // pred_fallthru
      _
    // Predicated region
    $region10: #{_decoder_call.1} parent=1 // pred_check
      _
    $region11: #{_decoder_call.1} parent=1 // pred_check_branch
      %16 = sbr.rel (0) target = $region13
    $region12: #{_decoder_call.1} parent=1 // pred_region
      _
    $region13: #{_decoder_call.1} parent=1 // pred_fallthru
      _
    // Predicated region
    $region14: #{_decoder_call.1} parent=1 // pred_check
      _
    $region15: #{_decoder_call.1} parent=1 // pred_check_branch
      %18 = sbr.rel (0) target = $region17
    $region16: #{_decoder_call.1} parent=1 // pred_region
      _
    $region17: #{_decoder_call.1} parent=1 // pred_fallthru
      _
    // Predicated region
    $region18: #{_decoder_call.1} parent=1 // pred_check
      _
    $region19: #{_decoder_call.1} parent=1 // pred_check_branch
      %20 = sbr.rel (0) target = $region21
    $region20: #{_decoder_call.1} parent=1 // pred_region
      _
    $region21: #{_decoder_call.1} parent=1 // pred_fallthru
      _
    %v21 = vld [vmem:[%s0] sm:$0xff]
    %v22 = vld [vmem:[%s1] sm:$0xff]
    %v23 = vld [vmem:[%s1 + $0x8] sm:$0xff]
    %v24 = vld [vmem:[%s1 + $0x10] sm:$0xff]
    %v25 = vld [vmem:[%s1 + $0x18] sm:$0xff]
    %v26 = vld [vmem:[%s2] sm:$0x1]
    %v28 = vlaneseq
    %v29 = vshrl.u32 %v28, 7
    %v30 = vsub.s32 0, %v29
    %v31 = vrot.slane %v26, %v30
    %vm33 = vcmask 261120
    %v35 = vsel %vm33, %v21, 0
    %37 = vmatprep.subr.mxu0 0.0
    %38 = vmatpush1.msra.mxu0 %v22
    %39 = vmatprep.subr.mxu0 0.0
    %40 = vmatpush1.msra.mxu0 %v23
    %41 = vmatprep.subr.mxu0 0.0
    %42 = vmatpush1.msra.mxu0 %v24
    %43 = vmatprep.subr.mxu0 0.0
    %44 = vmatpush1.msra.mxu0 %v25
    %45 = vmatprep.subr.mxu0 0.0
    %46 = vmatpush1.msra.mxu0 0.0
    %47 = vmatprep.subr.mxu0 0.0
    %48 = vmatpush1.msra.mxu0 0.0
    %49 = vmatprep.subr.mxu0 0.0
    %50 = vmatpush1.msra.mxu0 0.0
    %51 = vmatprep.subr.mxu0 0.0
    %52 = vmatpush1.msra.mxu0 0.0
    %53 = vmatprep.subr.mxu0 0.0
    %54 = vmatpush1.msra.mxu0 0.0
    %55 = vmatprep.subr.mxu0 0.0
    %56 = vmatpush1.msra.mxu0 0.0
    %57 = vmatprep.subr.mxu0 0.0
    %58 = vmatpush1.msra.mxu0 0.0
    %59 = vmatprep.subr.mxu0 0.0
    %60 = vmatpush1.msra.mxu0 0.0
    %61 = vmatprep.subr.mxu0 0.0
    %62 = vmatpush1.msra.mxu0 0.0
    %63 = vmatprep.subr.mxu0 0.0
    %64 = vmatpush1.msra.mxu0 0.0
    %65 = vmatprep.subr.mxu0 0.0
    %66 = vmatpush1.msra.mxu0 0.0
    %67 = vmatprep.subr.mxu0 0.0
    %68 = vmatpush1.msra.mxu0 0.0
    %69 = vmatprep.subr.mxu0 0.0
    %70 = vmatpush1.msra.mxu0 0.0
    %71 = vmatprep.subr.mxu0 0.0
    %72 = vmatpush1.msra.mxu0 0.0
    %73 = vmatprep.subr.mxu0 0.0
    %74 = vmatpush1.msra.mxu0 0.0
    %75 = vmatprep.subr.mxu0 0.0
    %76 = vmatpush1.msra.mxu0 0.0
    %77 = vmatprep.subr.mxu0 0.0
    %78 = vmatpush1.msra.mxu0 0.0
    %79 = vmatprep.subr.mxu0 0.0
    %80 = vmatpush1.msra.mxu0 0.0
    %81 = vmatprep.subr.mxu0 0.0
    %82 = vmatpush1.msra.mxu0 0.0
    %83 = vmatprep.subr.mxu0 0.0
    %84 = vmatpush1.msra.mxu0 0.0
    %85 = vmatprep.subr.mxu0 0.0
    %86 = vmatpush1.msra.mxu0 0.0
    %87 = vmatprep.subr.mxu0 0.0
    %88 = vmatpush1.msra.mxu0 0.0
    %89 = vmatprep.subr.mxu0 0.0
    %90 = vmatpush1.msra.mxu0 0.0
    %91 = vmatprep.subr.mxu0 0.0
    %92 = vmatpush1.msra.mxu0 0.0
    %93 = vmatprep.subr.mxu0 0.0
    %94 = vmatpush1.msra.mxu0 0.0
    %95 = vmatprep.subr.mxu0 0.0
    %96 = vmatpush1.msra.mxu0 0.0
    %97 = vmatprep.subr.mxu0 0.0
    %98 = vmatpush1.msra.mxu0 0.0
    %99 = vmatprep.subr.mxu0 0.0
    %100 = vmatpush1.msra.mxu0 0.0
    %101 = vmatprep.mubr.f32.mxu0 0.0
    %102 = vmatmul.mubr.f32.gmra.mrb[0].mxu0 %v35
    %v103 = vpop.f32.mrb[0].mxu0
    %v104 = vadd.f32 %v31, %v103
    %v105 = vpop.f32.mrb[0].mxu0
    %106 = vdwg.mxu0
    %v107 = vmul.f32 %v104, 0.5
    %v108 = vtanh.pop %v107
    %v109 = vadd.f32 %v108, 1.0
    %v110 = vmul.f32 %v109, 0.5
    %v111 = vld [vmem:[%s3] sm:$0x1]
    %v112 = vld [vmem:[%s4] sm:$0x1]
    %v114 = vlaneseq
    %v115 = vshrl.u32 %v114, 7
    %v116 = vsub.s32 0, %v115
    %v117 = vrot.slane %v112, %v116
    %v119 = vmul.f32 %v117, %v110
    %v121 = vlaneseq
    %v122 = vshrl.u32 %v121, 7
    %v123 = vsub.s32 0, %v122
    %v124 = vrot.slane %v111, %v123
    %v126 = vadd.f32 %v124, %v119
    %vm127 = vcmask 130048
    %128 = vst.msk [vmem:[#allocation2] sm:$0xff] %vm127, %v126
    // Predicated region
    $region22: #{_decoder_call.1} parent=1 // pred_check
      _
    $region23: #{_decoder_call.1} parent=1 // pred_check_branch
      %130 = sbr.rel (0) target = $region25
    $region24: #{_decoder_call.1} parent=1 // pred_region
      %s132 = ssub.s32 128, 128
      %133 = vsyncadd [#allocation3], %s132
      %s135 = sshll.u32 [#allocation2], 4
      %s136 = int_to_ptr.vmem [resolvable:$true] %s135
      %138 = dma.vmem_to_hbm [thread:$0]  %s136, 128, %s5, [#allocation3]
    $region25: #{_decoder_call.1} parent=1 // pred_fallthru
      _
    // Predicated region
    $region26: #{_decoder_call.1} parent=1 // pred_check
      _
    $region27: #{_decoder_call.1} parent=1 // pred_check_branch
      %140 = sbr.rel (0) target = $region29
    $region28: #{_decoder_call.1} parent=1 // pred_region
      %141 = dma.done [#allocation3], 128
    $region29: #{_decoder_call.1} parent=1 // pred_fallthru
      _
    %142 = vsyncpa [#allocation3], 1

</llo_original>
